<compile_context>
chip_gen: v7x
topology: tpu7x:2x2x1
jax: 0.10.0
libtpu: 0.0.40
codegen_flags: <defaults>
</compile_context>

<pallas_src>
import numpy as np
import jax
import jax.numpy as jnp
from jax.experimental import pallas as pl
from jax.experimental.pallas import tpu as pltpu


# ----------------------------- parameter setup ------------------------------

_F_SUBLANES = 16        # pad cos/sin row blocks to a multiple of 16 sublanes (bf16 tile)
_T_TILE_MAX = 512       # lane tile over frames (512 ~ 85% of HBM roofline, fits v7x VMEM)
_STREAM_MIN_NFFT = 512  # below this, K=hop underfills the MXU -> keep the gather path


def _round_up(x: int, m: int) -> int:
    return ((x + m - 1) // m) * m


def _hann_window(n: int) -> np.ndarray:
    # periodic Hann window (torch.hann_window default, torchaudio Spectrogram default)
    k = np.arange(n)
    return 0.5 - 0.5 * np.cos(2.0 * np.pi * k / n)


def _dft_basis(n_fft: int):
    # Windowed one-sided real-DFT basis with the window folded in.
    n = np.arange(n_fft)[:, None]
    f = np.arange(n_fft // 2 + 1)[None, :]
    ang = 2.0 * np.pi * n * f / n_fft
    w = _hann_window(n_fft)[:, None]
    cos_b = (w * np.cos(ang)).astype(np.float32)
    sin_b = (-w * np.sin(ang)).astype(np.float32)
    return cos_b, sin_b


def _mel_filterbank(sample_rate: int, n_fft: int, n_mels: int) -> np.ndarray:
    # TODO(synk): deterministic HTK-scale triangular stand-in for librosa.filters.mel
    # (Slaney scale + slaney norm); swap in the real matrix for bit-parity — it folds
    # into the DFT basis identically.
    n_bins = n_fft // 2 + 1
    f_max = sample_rate / 2.0

    def hz_to_mel(h):
        return 2595.0 * np.log10(1.0 + np.asarray(h, dtype=np.float64) / 700.0)

    def mel_to_hz(m):
        return 700.0 * (10.0 ** (np.asarray(m, dtype=np.float64) / 2595.0) - 1.0)

    mels = np.linspace(hz_to_mel(0.0), hz_to_mel(f_max), n_mels + 2)
    hz = mel_to_hz(mels)
    bin_freqs = np.linspace(0.0, f_max, n_bins)
    fb = np.zeros((n_mels, n_bins), dtype=np.float32)
    for m in range(n_mels):
        lo, c, hi = hz[m], hz[m + 1], hz[m + 2]
        up = (bin_freqs - lo) / max(c - lo, 1e-8)
        down = (hi - bin_freqs) / max(hi - c, 1e-8)
        fb[m] = np.maximum(0.0, np.minimum(up, down)).astype(np.float32)
    return fb


def _basis_fmajor(n_fft: int, mel_fb):
    """Frequency-major basis: rows = [cos | sin], each block padded to a multiple of
    _F_SUBLANES sublanes.  Mel (if any) is folded in.  Returns (basisT, n_out, f_half)."""
    cos_b, sin_b = _dft_basis(n_fft)            # (n_fft, n_bins)
    if mel_fb is not None:
        melT = mel_fb.T.astype(np.float32)      # (n_bins, n_mels)
        cos_b = cos_b @ melT
        sin_b = sin_b @ melT
    n_out = int(cos_b.shape[1])
    f_half = _round_up(n_out, _F_SUBLANES)
    basisT = np.zeros((2 * f_half, n_fft), dtype=np.float32)
    basisT[:n_out, :] = cos_b.T
    basisT[f_half:f_half + n_out, :] = sin_b.T
    return basisT, n_out, f_half


# -------------------------------- kernels -------------------------------------

def _make_gather_kernel(f_half: int):
    # Small-n_fft path: frames already materialized (transposed) in HBM.
    def kernel(basis_ref, frames_ref, out_ref):
        # basis_ref: (2*f_half, n_fft) bf16; frames_ref: (1, n_fft, t_tile) bf16
        y = jnp.dot(basis_ref[...], frames_ref[0],
                    preferred_element_type=jnp.float32)
        re = y[:f_half]
        im = y[f_half:]
        # Forward-only magnitude; add eps before sqrt if this is ever differentiated.
        out_ref[0] = jnp.sqrt(re * re + im * im).astype(out_ref.dtype)
    return kernel


def _make_stream_kernel(f_half: int, hop: int, t_tile: int, t_slab: int):
    # Large-n_fft path: in-kernel framing from the hop-chunked signal (no 4x gather).
    f2 = 2 * f_half

    def kernel(chunks_hbm, basis_ref, out_ref, slab_ref, sem):
        b = pl.program_id(0)
        t = pl.program_id(1)
        t0 = pl.multiple_of(t * t_tile, 128)
        cp = pltpu.make_async_copy(
            chunks_hbm.at[b, :, pl.ds(t0, t_slab)], slab_ref, sem)
        cp.start()
        cp.wait()
        # TODO(synk): double-buffer the slab across grid steps (prefetch tile t+1 while
        # computing tile t) to hide this DMA behind the matmuls.
        slab = slab_ref[...]                                   # (hop, t_slab) bf16
        acc = jnp.zeros((f2, t_tile), dtype=jnp.float32)
        for q in range(4):                                     # frame[t] = chunks[t:t+4]
            acc = acc + jnp.dot(basis_ref[:, q * hop:(q + 1) * hop],
                                slab[:, q:q + t_tile],
                                preferred_element_type=jnp.float32)
        re = acc[:f_half]
        im = acc[f_half:]
        out_ref[0] = jnp.sqrt(re * re + im * im).astype(out_ref.dtype)
    return kernel


# ------------------------------- wrappers ------------------------------------

def _stft_scale(x_flat: jax.Array, scale: int, mel_fb, out_dtype=jnp.bfloat16) -> jax.Array:
    BC, T = x_flat.shape
    n_fft = scale
    hop = scale // 4
    pad = n_fft // 2

    basis_np, n_out, f_half = _basis_fmajor(n_fft, mel_fb)
    f2 = 2 * f_half
    basis = jnp.asarray(basis_np, dtype=jnp.bfloat16)

    n_frames = 1 + T // hop

    # Lane tile over frames (output last dim).  Shrink it when B*C alone cannot give
    # v7x's two TensorCores at least two "parallel" blocks.
    t_tile = min(_T_TILE_MAX, _round_up(n_frames, 128))
    if BC * (_round_up(n_frames, t_tile) // t_tile) < 2 and t_tile > 128:
        t_tile = max(128, _round_up((n_frames + 1) // 2, 128))
    n_frames_pad = _round_up(n_frames, t_tile)
    n_t = n_frames_pad // t_tile
    grid = (BC, n_t)

    # center=True reflect padding (torchaudio default), in bf16 so all later audio
    # traffic is half-width.
    x_pad = jnp.pad(x_flat.astype(jnp.bfloat16), ((0, 0), (pad, pad)), mode="reflect")

    out_bytes = jnp.dtype(out_dtype).itemsize
    out_shape = jax.ShapeDtypeStruct((BC, f_half, n_frames_pad), out_dtype)
    out_spec = pl.BlockSpec((1, f_half, t_tile), lambda b, t: (b, 0, t))
    # Constant index_map -> the Pallas pipeline DMAs the basis exactly once across the
    # grid; only the second (double) buffer is wasted VMEM, counted in vmem_need below.
    basis_spec = pl.BlockSpec((f2, n_fft), lambda b, t: (0, 0))

    use_streaming = (n_fft >= _STREAM_MIN_NFFT) and (hop % 128 == 0)

    if use_streaming:
        # In-kernel framing: frame[t] = concat(chunk[t .. t+3]), chunk[j] = x_pad[j*hop:(j+1)*hop].
        t_slab = t_tile + 128
        n_chunks = -(-x_pad.shape[1] // hop)
        x_pad = jnp.pad(x_pad, ((0, 0), (0, n_chunks * hop - x_pad.shape[1])))
        # chunksT[bc, r, j] = x_pad[bc, j*hop + r]; one small XLA transpose of the
        # audio is the only wrapper-side data movement on this path.
        chunksT = jnp.transpose(x_pad.reshape(BC, n_chunks, hop), (0, 2, 1))
        n_chunks_tot = n_frames_pad + 128
        chunksT = jnp.pad(chunksT, ((0, 0), (0, 0), (0, n_chunks_tot - n_chunks)))

        kernel = _make_stream_kernel(f_half, hop, t_tile, t_slab)
        in_specs = [pl.BlockSpec(memory_space=pl.ANY), basis_spec]
        args = (chunksT, basis)
        scratch = (pltpu.VMEM((hop, t_slab), jnp.bfloat16), pltpu.SemaphoreType.DMA)
        in_bytes = BC * n_t * hop * t_slab * 2
        vmem_need = (hop * t_slab * 2                  # slab scratch
                     + 2 * f2 * n_fft * 2              # basis (double buffer)
                     + 2 * f_half * t_tile * out_bytes  # out block (double buffer)
                     + 2 * f2 * t_tile * 4             # f32 accumulator + temps
                     + (2 << 20))
    else:
        # Tiny-n_fft path: framing by gather (4x expansion is small at n_fft=64/128 and
        # K=hop would underfill the MXU).  Gather directly in transposed order so the
        # kernel output is already frequency-major.
        idxT = np.arange(n_fft)[:, None] + np.arange(n_frames_pad)[None, :] * hop
        idxT = np.minimum(idxT, x_pad.shape[1] - 1)    # pad frames: clamped, sliced off
        framesT = x_pad[:, idxT]                       # (BC, n_fft, n_frames_pad) bf16

        kernel = _make_gather_kernel(f_half)
        in_specs = [basis_spec,
                    pl.BlockSpec((1, n_fft, t_tile), lambda b, t: (b, 0, t))]
        args = (basis, framesT)
        scratch = ()
        in_bytes = BC * n_fft * n_frames_pad * 2
        vmem_need = (2 * n_fft * t_tile * 2            # frames block (double buffer)
                     + 2 * f2 * n_fft * 2              # basis (double buffer)
                     + 2 * f_half * t_tile * out_bytes  # out block (double buffer)
                     + 2 * f2 * t_tile * 4             # f32 y + magnitude temps
                     + (2 << 20))

    flops = 2 * f2 * n_fft * BC * n_frames_pad
    bytes_accessed = in_bytes + f2 * n_fft * 2 + BC * f_half * n_frames_pad * out_bytes
    # Explicit VMEM budget from the actual buffers, capped at 40 MiB so even large
    # raw-spectrogram scales leave headroom inside v7x's 64 MiB physical VMEM.
    vmem_limit = int(min(max(vmem_need, 24 << 20), 40 << 20))

    out = pl.pallas_call(
        kernel,
        out_shape=out_shape,
        grid_spec=pltpu.PrefetchScalarGridSpec(
            num_scalar_prefetch=0,
            grid=grid,
            in_specs=in_specs,
            out_specs=out_spec,
            scratch_shapes=scratch,
        ),
        compiler_params=pltpu.CompilerParams(
            dimension_semantics=("parallel", "parallel"),
            vmem_limit_bytes=vmem_limit,
        ),
        cost_estimate=pl.CostEstimate(
            flops=int(flops),
            transcendentals=int(BC * f_half * n_frames_pad),
            bytes_accessed=int(bytes_accessed),
        ),
    )(*args)

    # Strip sublane / lane padding; layout already matches PyTorch's [B*C, F, T_frames]
    # (no post-kernel transpose).
    return out[:, :n_out, :n_frames]


def multi_scale_stft(x: jax.Array, scales, sample_rate: int, num_mels=None,
                     out_dtype=jnp.bfloat16):
    """Equivalent of MultiScaleSTFT.forward(x) with magnitude=True, normalized=False,
    with_mixtures=False, add_scale=False.  x: [B, C, T].  Output dtype defaults to
    bf16 (halves the HBM write stream); pass out_dtype=jnp.float32 if needed."""
    B, C, T = x.shape
    x_flat = x.reshape(B * C, T)   # rearrange 'b c t -> (b c) t'
    outs = []
    for i, scale in enumerate(scales):
        mel_fb = None
        if num_mels is not None:
            mel_fb = _mel_filterbank(sample_rate, scale, num_mels[i])
        outs.append(_stft_scale(x_flat, scale, mel_fb, out_dtype))
    return outs


# ---------------------------- pure-JAX reference ------------------------------

def _reference_scale(x_flat, scale, mel_fb):
    BC, T = x_flat.shape
    n_fft = scale
    hop = scale // 4
    pad = n_fft // 2
    x_pad = jnp.pad(x_flat, ((0, 0), (pad, pad)), mode="reflect")
    n_frames = 1 + T // hop
    idx = (np.arange(n_frames) * hop)[:, None] + np.arange(n_fft)[None, :]
    frames = x_pad[:, idx]                        # (BC, n_frames, n_fft) f32
    cos_b, sin_b = _dft_basis(n_fft)
    if mel_fb is not None:
        cos_b = cos_b @ mel_fb.T
        sin_b = sin_b @ mel_fb.T
    re = jnp.einsum("btn,nf->bft", frames, jnp.asarray(cos_b))
    im = jnp.einsum("btn,nf->bft", frames, jnp.asarray(sin_b))
    return jnp.sqrt(re * re + im * im)            # (BC, F, T_frames)


# --------------------------------- main --------------------------------------

if __name__ == "__main__":
    key = jax.random.PRNGKey(0)
    B, C, T = 2, 2, 256
    sample_rate = 16000
    scales = [64, 128]
    num_mels = [8, 16]

    x = jax.random.normal(key, (B, C, T), dtype=jnp.float32)
    x_flat = x.reshape(B * C, T)

    # 1) mel path (tiny n_fft -> gather framing)
    outs = multi_scale_stft(x, scales, sample_rate, num_mels)
    for o in outs:
        jax.block_until_ready(o)
    assert outs[0].shape == (B * C, num_mels[0], 1 + T // (scales[0] // 4)), outs[0].shape
    assert outs[1].shape == (B * C, num_mels[1], 1 + T // (scales[1] // 4)), outs[1].shape
    assert all(bool(jnp.all(jnp.isfinite(o.astype(jnp.float32)))) for o in outs)

    for i, scale in enumerate(scales):
        fb = _mel_filterbank(sample_rate, scale, num_mels[i])
        ref = _reference_scale(x_flat, scale, fb)
        got = outs[i].astype(jnp.float32)
        err = float(jnp.max(jnp.abs(got - ref)) / (jnp.max(jnp.abs(ref)) + 1e-6))
        assert err < 5e-2, f"scale {scale}: normalized max err {err}"

    # 2) raw spectrogram path (num_mels=None)
    no_mel = multi_scale_stft(x, [64], sample_rate, None)
    jax.block_until_ready(no_mel[0])
    assert no_mel[0].shape == (B * C, 64 // 2 + 1, 1 + T // 16), no_mel[0].shape
    ref = _reference_scale(x_flat, 64, None)
    err = float(jnp.max(jnp.abs(no_mel[0].astype(jnp.float32) - ref))
                / (jnp.max(jnp.abs(ref)) + 1e-6))
    assert err < 5e-2, f"raw spectrogram: normalized max err {err}"

    # 3) large-scale streaming path (in-kernel framing, no 4x gather)
    Ts = 2048
    xs = jax.random.normal(jax.random.PRNGKey(1), (1, 1, Ts), dtype=jnp.float32)
    stream = multi_scale_stft(xs, [512], sample_rate, [32])
    jax.block_until_ready(stream[0])
    assert stream[0].shape == (1, 32, 1 + Ts // 128), stream[0].shape
    fb = _mel_filterbank(sample_rate, 512, 32)
    ref = _reference_scale(xs.reshape(1, Ts), 512, fb)
    err = float(jnp.max(jnp.abs(stream[0].astype(jnp.float32) - ref))
                / (jnp.max(jnp.abs(ref)) + 1e-6))
    assert err < 5e-2, f"streaming path: normalized max err {err}"

    print("KERNEL_OK")
</pallas_src>

<mosaic_0001>
module attributes {stable_mosaic.version = 11 : i64} {
  func.func @kernel(%arg0: i32, %arg1: i32, %arg2: memref<32x64xbf16, #tpu.memory_space<vmem>>, %arg3: memref<1x64x128xbf16, #tpu.memory_space<vmem>>, %arg4: memref<1x16x128xbf16, #tpu.memory_space<vmem>>) attributes {dimension_semantics = [#tpu.dimension_semantics<parallel>, #tpu.dimension_semantics<parallel>], iteration_bounds = array<i64: 4, 1>, scalar_prefetch = 0 : i64, scratch_operands = 0 : i64, tpu.core_type = #tpu.core_type<tc>, window_params = [{pipeline_mode = #tpu.pipeline_mode<synchronous>, transform_indices = @transform_0, window_bounds = array<i64: 32, 64>}, {transform_indices = @transform_1, window_bounds = array<i64: 1, 64, 128>}, {transform_indices = @transform_2, window_bounds = array<i64: 1, 16, 128>}]} {
    %c0 = arith.constant 0 : index
    %c0_0 = arith.constant 0 : index
    %0 = vector.load %arg2[%c0, %c0_0] : memref<32x64xbf16, #tpu.memory_space<vmem>>, vector<32x64xbf16>
    %c0_1 = arith.constant 0 : index
    %c0_2 = arith.constant 0 : index
    %c0_3 = arith.constant 0 : index
    %1 = vector.load %arg3[%c0_1, %c0_2, %c0_3] : memref<1x64x128xbf16, #tpu.memory_space<vmem>>, vector<1x64x128xbf16>
    %2 = vector.shape_cast %1 : vector<1x64x128xbf16> to vector<64x128xbf16>
    %cst = arith.constant dense<0.000000e+00> : vector<32x128xf32>
    %3 = tpu.matmul %0, %2, %cst {dimension_numbers = #tpu.dot_dimension_numbers<[1], [0], [0], [1], [0, 0, 1, 1], [], []>} : vector<32x64xbf16>, vector<64x128xbf16>, vector<32x128xf32> -> vector<32x128xf32>
    %4 = vector.extract_strided_slice %3 {offsets = [0, 0], sizes = [16, 128], strides = [1, 1]} : vector<32x128xf32> to vector<16x128xf32>
    %5 = vector.extract_strided_slice %3 {offsets = [16, 0], sizes = [16, 128], strides = [1, 1]} : vector<32x128xf32> to vector<16x128xf32>
    %6 = arith.mulf %4, %4 : vector<16x128xf32>
    %7 = arith.mulf %5, %5 : vector<16x128xf32>
    %8 = arith.addf %6, %7 : vector<16x128xf32>
    %9 = math.sqrt %8 : vector<16x128xf32>
    %10 = arith.truncf %9 : vector<16x128xf32> to vector<16x128xbf16>
    %c0_4 = arith.constant 0 : index
    %c0_5 = arith.constant 0 : index
    %c0_6 = arith.constant 0 : index
    %11 = vector.load %arg4[%c0_4, %c0_5, %c0_6] : memref<1x16x128xbf16, #tpu.memory_space<vmem>>, vector<1x16x128xbf16>
    %12 = vector.shape_cast %11 : vector<1x16x128xbf16> to vector<16x128xbf16>
    %13 = vector.shape_cast %10 : vector<16x128xbf16> to vector<1x16x128xbf16>
    tpu.vector_store %arg4[%c0_4, %c0_5, %c0_6], %13 {strides = array<i32>} : memref<1x16x128xbf16, #tpu.memory_space<vmem>>, vector<1x16x128xbf16>,
    return
  }
  func.func @transform_0(%arg0: i32, %arg1: i32) -> (i32, i32) {
    %c0_i32 = arith.constant 0 : i32
    %c0_i32_0 = arith.constant 0 : i32
    %c0_i32_1 = arith.constant 0 : i32
    return %c0_i32, %c0_i32_0 : i32, i32
  }
  func.func @transform_1(%arg0: i32, %arg1: i32) -> (i32, i32, i32) {
    %c0_i32 = arith.constant 0 : i32
    %c0_i32_0 = arith.constant 0 : i32
    return %arg0, %c0_i32, %arg1 : i32, i32, i32
  }
  func.func @transform_2(%arg0: i32, %arg1: i32) -> (i32, i32, i32) {
    %c0_i32 = arith.constant 0 : i32
    %c0_i32_0 = arith.constant 0 : i32
    return %arg0, %c0_i32, %arg1 : i32, i32, i32
  }
}

</mosaic_0001>

<llo_original>
// kernel: tpu_custom_call.1
$region0: #{tpu_custom_call.1}
  #allocation0 [shape = 'u32[]', space=smem, size = 0x4, offset = 0x4, fixed_abs, tag = 'smem constant byte address 0x4 - core index']
  #allocation1 [shape = 'u32[144,128]{1,0:T(1,128)}', space=vmem, size = 0x12000, scoped, tag = 'internal scratch']
  %s0 = inlined_call_operand.hbm [shape: bf16[32,64], index: 0, kind: input, shape index: {}]
  %s1 = inlined_call_operand.hbm [shape: bf16[4,64,128], index: 1, kind: input, shape index: {}]
  %s2 = inlined_call_operand.hbm [shape: bf16[4,16,128], index: 2, kind: output, shape index: {}]
  %s3 = sld [smem:[#allocation0]]
  $region49: #{tpu_custom_call.1} parent=0
    _
  %s5 = ssub.s32 1, %s3
  %s6 = scalar_select 0, %s5, %s3
  $region1: #{tpu_custom_call.1} parent=0
    #allocation2 [shape = 'u8[8192]{0}', space=vmem, size = 0x2000, scoped, tag = 'input window, operand 0, single buffered']
    #allocation3 [shape = 's32[2]{0}', space=sflag, size = 0x8, scoped, tag = 'scoped memory for tpu_custom_call.1']
    #allocation4 [shape = 's32[2]{0}', space=sflag, size = 0x8, scoped, tag = 'scoped memory for tpu_custom_call.1']
    #allocation5 [shape = 'u8[32768]{0}', space=vmem, size = 0x8000, scoped, tag = 'input window, operand 1']
    #allocation6 [shape = 's32[2]{0}', space=sflag, size = 0x8, scoped, tag = 'scoped memory for tpu_custom_call.1']
    #allocation7 [shape = 'u8[8192]{0}', space=vmem, size = 0x2000, scoped, tag = 'output window, operand 0']
    %7 = vsyncpa [#allocation3], 0
    %8 = vsyncpa [#allocation6], 0
    %s9 = scalar_lea.sflag [#allocation6], 1
    %10 = vsyncpa %s9, 0
    %11 = vsyncpa [#allocation4], 0
    %s12 = scalar_lea.sflag [#allocation4], 1
    %13 = vsyncpa %s12, 0
    loop: start=0, step=1, limit=6
    $region2: #{tpu_custom_call.1} parent=1 // loop_pre_header
      _
    $region3: #{tpu_custom_call.1} parent=1 // loop_header
      %s15 = sphi 0, %s19
      %p16 = scmp.ge.s32.totalorder %s15, 6
      %s22 = sphi 0, %s34
      %s23 = sphi 0, %s30
      %s24 = sphi 0, %s22
      %s25 = sphi 0, %s23
      %s26 = sphi 0, %s24
      %s27 = sphi 0, %s25
      %s35 = sphi 0, %s35
      %s37 = sphi 0, %s35
      %s38 = sphi 0, %s37
      %s52 = sphi 0, %s38
      %s60 = sphi 0, %s62
      %s63 = sphi 0, %s60
      %s64 = sphi 0, %s63
      %s80 = sphi 0, %s64
      %s88 = sphi 0, %s90
      %s91 = sphi 0, %s88
      %s92 = sphi 0, %s91
      %s108 = sphi 0, %s92
    $region4: #{tpu_custom_call.1} parent=1 // loop_header_branch
      %18 = sbr.rel (%p16) target = $region8
    $region5: #{tpu_custom_call.1} parent=1 // loop_body
      %s20 = ssub.s32 %s15, 1
      %s21 = ssub.s32 %s15, 2
      %s28 = sadd.s32 1, %s23
      %p29 = scmp.ge.s32.totalorder %s28, 1
      %s30 = scalar_select %p29, 0, %s28
      %s31 = sadd.s32 1, %s22
      %s32 = scalar_select %p29, %s31, %s22
      %p33 = scmp.ge.s32.totalorder %s32, 4
      %s34 = scalar_select %p33, 0, %s32
      %s36 = sadd.s32 %s35, 1
      %p39 = scmp.eq.s32.totalorder %s15, 3
      %p40 = scmp.ne.s32.totalorder %s35, %s37
      %p41 = scmp.eq.s32.totalorder %s15, 0
      %p42 = por %p40, %p41
      %p43 = scmp.ne.s32.totalorder %s35, %s37
      %p44 = scmp.eq.s32.totalorder %s20, 3
      %p45 = por %p43, %p44
      %p46 = scmp.ne.s32.totalorder %s37, %s38
      %p47 = scmp.eq.s32.totalorder %s20, 0
      %p48 = por %p46, %p47
      %p49 = scmp.ne.s32.totalorder %s37, %s38
      %p50 = scmp.eq.s32.totalorder %s21, 3
      %p51 = por %p49, %p50
      %p53 = scmp.ne.s32.totalorder %s38, %s52
      %p54 = scmp.eq.s32.totalorder %s21, 0
      %p55 = por %p53, %p54
      %s56 = ssub.s32 %s22, %s34
      %s57 = ssub.s32 %s23, %s30
      %s58 = sor.u32 %s56, %s57
      %p59 = scmp.eq.s32.totalorder %s58, 0
      %s61 = sadd.s32 %s60, 1
      %s62 = scalar_select %p59, %s60, %s61
      %p65 = pneg %p59
      %p66 = scmp.eq.s32.totalorder %s15, 3
      %p67 = por %p65, %p66
      %p68 = scmp.ne.s32.totalorder %s60, %s63
      %p69 = scmp.eq.s32.totalorder %s15, 0
      %p70 = por %p68, %p69
      %p71 = scmp.ne.s32.totalorder %s60, %s63
      %p72 = scmp.eq.s32.totalorder %s20, 3
      %p73 = por %p71, %p72
      %p74 = scmp.ne.s32.totalorder %s63, %s64
      %p75 = scmp.eq.s32.totalorder %s20, 0
      %p76 = por %p74, %p75
      %p77 = scmp.ne.s32.totalorder %s63, %s64
      %p78 = scmp.eq.s32.totalorder %s21, 3
      %p79 = por %p77, %p78
      %p81 = scmp.ne.s32.totalorder %s64, %s80
      %p82 = scmp.eq.s32.totalorder %s21, 0
      %p83 = por %p81, %p82
      %s84 = ssub.s32 %s22, %s34
      %s85 = ssub.s32 %s23, %s30
      %s86 = sor.u32 %s84, %s85
      %p87 = scmp.eq.s32.totalorder %s86, 0
      %s89 = sadd.s32 %s88, 1
      %s90 = scalar_select %p87, %s88, %s89
      %p93 = pneg %p87
      %p94 = scmp.eq.s32.totalorder %s15, 3
      %p95 = por %p93, %p94
      %p96 = scmp.ne.s32.totalorder %s88, %s91
      %p97 = scmp.eq.s32.totalorder %s15, 0
      %p98 = por %p96, %p97
      %p99 = scmp.ne.s32.totalorder %s88, %s91
      %p100 = scmp.eq.s32.totalorder %s20, 3
      %p101 = por %p99, %p100
      %p102 = scmp.ne.s32.totalorder %s91, %s92
      %p103 = scmp.eq.s32.totalorder %s20, 0
      %p104 = por %p102, %p103
      %p105 = scmp.ne.s32.totalorder %s91, %s92
      %p106 = scmp.eq.s32.totalorder %s21, 3
      %p107 = por %p105, %p106
      %p109 = scmp.ne.s32.totalorder %s92, %s108
      %p110 = scmp.eq.s32.totalorder %s21, 0
      %p111 = por %p109, %p110
      %p112 = scmp.le.s32.totalorder 1, %s15
      %p113 = scmp.lt.s32.totalorder %s15, 5
      %p114 = pnand %p112, %p113
      %p115 = pneg %p114
      // Predicated region
      $region9: #{tpu_custom_call.1} parent=5 // pred_check
        _
      $region10: #{tpu_custom_call.1} parent=5 // pred_check_branch
        %117 = sbr.rel (%p114) target = $region12
      $region11: #{tpu_custom_call.1} parent=5 // pred_region
        %s118 = ssub.s32 %s15, 1
        // Predicated region
        $region13: #{tpu_custom_call.1} parent=11 // pred_check
          %p119 = pneg %p48
        $region14: #{tpu_custom_call.1} parent=11 // pred_check_branch
          %121 = sbr.rel (%p119) target = $region16
        $region15: #{tpu_custom_call.1} parent=11 // pred_region
          %s123 = ssub.s32 256, 256
          %124 = vsyncadd [#allocation3], %s123
          %s125 = sshll.u32 [#allocation2], 4
          %s126 = int_to_ptr.vmem [resolvable:$true] %s125
          %131 = dma.hbm_to_vmem [thread:$0]  %s0, 256, %s126, [#allocation3], 64, 64, 4
        $region16: #{tpu_custom_call.1} parent=11 // pred_fallthru
          _
      $region12: #{tpu_custom_call.1} parent=5 // pred_fallthru
        _
      %p132 = scmp.lt.s32.totalorder %s15, 4
      // Predicated region
      $region17: #{tpu_custom_call.1} parent=5 // pred_check
        %p133 = pneg %p132
      $region18: #{tpu_custom_call.1} parent=5 // pred_check_branch
        %135 = sbr.rel (%p133) target = $region20
      $region19: #{tpu_custom_call.1} parent=5 // pred_region
        // Predicated region
        $region21: #{tpu_custom_call.1} parent=19 // pred_check
          %p136 = pneg %p70
        $region22: #{tpu_custom_call.1} parent=19 // pred_check_branch
          %138 = sbr.rel (%p136) target = $region24
        $region23: #{tpu_custom_call.1} parent=19 // pred_region
          %s139 = sand.u32 %s60, 1
          %s140 = scalar_lea.sflag [#allocation6], %s139
          %s141 = sand.u32 %s60, 1
          %s142 = smul.addr %s141, 32
          %s143 = scalar_lea.vmem [#allocation5], %s142
          %s145 = ssub.s32 512, 512
          %146 = vsyncadd %s140, %s145
          %s147 = smul.addr %s22, 8
          %s148 = sadd.s32 %s23, %s147
          %s149 = smul.addr %s148, 64
          %s150 = scalar_lea.hbm %s1, %s149
          %s151 = sshll.u32 %s143, 4
          %s152 = int_to_ptr.vmem [resolvable:$true] %s151
          %157 = dma.hbm_to_vmem [thread:$0]  %s150, 512, %s152, %s140, 64, 64, 4
        $region24: #{tpu_custom_call.1} parent=19 // pred_fallthru
          _
      $region20: #{tpu_custom_call.1} parent=5 // pred_fallthru
        _
      %p158 = scmp.le.s32.totalorder 1, %s15
      %p159 = scmp.lt.s32.totalorder %s15, 5
      %p160 = pnand %p158, %p159
      %p161 = pneg %p160
      // Predicated region
      $region25: #{tpu_custom_call.1} parent=5 // pred_check
        _
      $region26: #{tpu_custom_call.1} parent=5 // pred_check_branch
        %163 = sbr.rel (%p160) target = $region28
      $region27: #{tpu_custom_call.1} parent=5 // pred_region
        %s164 = ssub.s32 %s15, 1
        // Predicated region
        $region29: #{tpu_custom_call.1} parent=27 // pred_check
          %p165 = pneg %p48
        $region30: #{tpu_custom_call.1} parent=27 // pred_check_branch
          %167 = sbr.rel (%p165) target = $region32
        $region31: #{tpu_custom_call.1} parent=27 // pred_region
          %168 = dma.done [#allocation3], 256
        $region32: #{tpu_custom_call.1} parent=27 // pred_fallthru
          _
        %s169 = sand.u32 %s63, 1
        %s170 = scalar_lea.sflag [#allocation6], %s169
        %s171 = sand.u32 %s63, 1
        %s172 = smul.addr %s171, 32
        %s173 = scalar_lea.vmem [#allocation5], %s172
        // Predicated region
        $region33: #{tpu_custom_call.1} parent=27 // pred_check
          %p174 = pneg %p76
        $region34: #{tpu_custom_call.1} parent=27 // pred_check_branch
          %176 = sbr.rel (%p174) target = $region36
        $region35: #{tpu_custom_call.1} parent=27 // pred_region
          %177 = dma.done %s170, 512
        $region36: #{tpu_custom_call.1} parent=27 // pred_fallthru
          _
        %p178 = pneg %p48
        %p179 = pneg %p45
        %s180 = sand.u32 %s63, 1
        %s181 = scalar_lea.sflag [#allocation6], %s180
        %s182 = sand.u32 %s63, 1
        %s183 = smul.addr %s182, 32
        %s184 = scalar_lea.vmem [#allocation5], %s183
        %p185 = pneg %p76
        %p186 = pneg %p73
        %p187 = pneg %p104
        %p188 = pneg %p101
        %s189 = sand.u32 %s91, 1
        %s190 = scalar_lea.sflag [#allocation4], %s189
        %s191 = sand.u32 %s91, 1
        %s192 = smul.addr %s191, 8
        %s193 = scalar_lea.vmem [#allocation7], %s192
        %v195 = vld [vmem:[#allocation2] sm:$0xf]
        %v196 = vld [vmem:[#allocation2 + $0x4] sm:$0xf]
        %v197 = vld [vmem:[#allocation2 + $0x8] sm:$0xf]
        %v198 = vld [vmem:[#allocation2 + $0xc] sm:$0xf]
        %v199 = vld [vmem:[%s173] sm:$0xf]
        %v200 = vld [vmem:[%s173 + $0x4] sm:$0xf]
        %v201 = vld [vmem:[%s173 + $0x8] sm:$0xf]
        %v202 = vld [vmem:[%s173 + $0xc] sm:$0xf]
        %v203 = vld [vmem:[%s173 + $0x10] sm:$0xf]
        %v204 = vld [vmem:[%s173 + $0x14] sm:$0xf]
        %v205 = vld [vmem:[%s173 + $0x18] sm:$0xf]
        %v206 = vld [vmem:[%s173 + $0x1c] sm:$0xf]
        %v211 = vunpack.c.l.b16 %v195
        %v212 = vunpack.c.l.b16 %v196
        %v213 = vunpack.c.l.b16 %v197
        %v214 = vunpack.c.l.b16 %v198
        %v215 = vpack.c.b16 %v212, %v211
        %v216 = vpack.c.b16 %v214, %v213
        %v225 = vunpack.c.l.b16 %v199
        %v226 = vunpack.c.l.b16 %v200
        %v227 = vunpack.c.l.b16 %v201
        %v228 = vunpack.c.l.b16 %v202
        %v229 = vunpack.c.l.b16 %v203
        %v230 = vunpack.c.l.b16 %v204
        %v231 = vunpack.c.l.b16 %v205
        %v232 = vunpack.c.l.b16 %v206
        %v233 = vpack.c.b16 %v226, %v225
        %v234 = vpack.c.b16 %v228, %v227
        %v235 = vpack.c.b16 %v230, %v229
        %v236 = vpack.c.b16 %v232, %v231
        %vm241 = vcmask 523264
        %v243 = vsel %vm241, %v215, 0
        %v246 = vsel %vm241, %v216, 0
        %248 = vmatprep.subr.bf16.mxu0 0
        %249 = vmatpush1.bf16.msra.mxu0 %v233
        %250 = vmatprep.subr.bf16.mxu0 0
        %251 = vmatpush1.bf16.msra.mxu0 %v234
        %252 = vmatprep.subr.bf16.mxu0 0
        %253 = vmatpush1.bf16.msra.mxu0 %v235
        %254 = vmatprep.subr.bf16.mxu0 0
        %255 = vmatpush1.bf16.msra.mxu0 %v236
        %256 = vmatprep.subr.bf16.mxu0 0
        %257 = vmatpush1.bf16.msra.mxu0 0
        %258 = vmatprep.subr.bf16.mxu0 0
        %259 = vmatpush1.bf16.msra.mxu0 0
        %260 = vmatprep.subr.bf16.mxu0 0
        %261 = vmatpush1.bf16.msra.mxu0 0
        %262 = vmatprep.subr.bf16.mxu0 0
        %263 = vmatpush1.bf16.msra.mxu0 0
        %264 = vmatprep.subr.bf16.mxu0 0
        %265 = vmatpush1.bf16.msra.mxu0 0
        %266 = vmatprep.subr.bf16.mxu0 0
        %267 = vmatpush1.bf16.msra.mxu0 0
        %268 = vmatprep.subr.bf16.mxu0 0
        %269 = vmatpush1.bf16.msra.mxu0 0
        %270 = vmatprep.subr.bf16.mxu0 0
        %271 = vmatpush1.bf16.msra.mxu0 0
        %272 = vmatprep.subr.bf16.mxu0 0
        %273 = vmatpush1.bf16.msra.mxu0 0
        %274 = vmatprep.subr.bf16.mxu0 0
        %275 = vmatpush1.bf16.msra.mxu0 0
        %276 = vmatprep.subr.bf16.mxu0 0
        %277 = vmatpush1.bf16.msra.mxu0 0
        %278 = vmatprep.subr.bf16.mxu0 0
        %279 = vmatpush1.bf16.msra.mxu0 0
        %280 = vmatprep.mubr.bf16.mxu0 0
        %281 = vmatmul.mubr.bf16.gmra.mrb[0].mxu0 %v243
        %v282 = vpop.f32.mrb[0].mxu0
        %v283 = vadd.f32 0.0, %v282
        %v284 = vpop.f32.mrb[0].mxu0
        %v285 = vpop.f32.mrb[0].mxu0
        %v286 = vadd.f32 0.0, %v285
        %v287 = vpop.f32.mrb[0].mxu0
        %288 = vmatprep.mubr.bf16.mxu0 0
        %289 = vmatmul.mubr.bf16.gmra.mrb[0].mxu0 %v246
        %v290 = vpop.f32.mrb[0].mxu0
        %v291 = vadd.f32 0.0, %v290
        %v292 = vpop.f32.mrb[0].mxu0
        %v293 = vpop.f32.mrb[0].mxu0
        %v294 = vadd.f32 0.0, %v293
        %v295 = vpop.f32.mrb[0].mxu0
        %296 = vdwg.mxu0
        %v297 = vmul.f32 %v283, %v283
        %v298 = vmul.f32 %v286, %v286
        %v299 = vmul.f32 %v291, %v291
        %v300 = vmul.f32 %v294, %v294
        %v301 = vadd.f32 %v297, %v299
        %v302 = vadd.f32 %v298, %v300
        %v303 = vrsqrt.pop %v301
        %v304 = vmul.f32 %v301, %v303
        %vm305 = vcmp.eq.f32.partialorder %v301, inf
        %v306 = vsel %vm305, %v301, %v304
        %vm307 = vcmp.eq.f32.partialorder %v301, 0.0
        %v308 = vand.u32 %v301, 2147483648
        %v309 = vsel %vm307, %v308, %v306
        %v310 = vrsqrt.pop %v302
        %v311 = vmul.f32 %v302, %v310
        %vm312 = vcmp.eq.f32.partialorder %v302, inf
        %v313 = vsel %vm312, %v302, %v311
        %vm314 = vcmp.eq.f32.partialorder %v302, 0.0
        %v315 = vand.u32 %v302, 2147483648
        %v316 = vsel %vm314, %v315, %v313
        %v317 = vpack.c.bf16 %v316, %v309
        %v319 = vunpack.c.l.b16 %v317
        %v320 = vunpack.c.h.b16 %v317
        %v321 = vpack.c.b16 %v319, %v319
        %v322 = vpack.c.b16 %v320, %v320
        %325 = vst [vmem:[%s193] sm:$0xf] %v321
        %326 = vst [vmem:[%s193 + $0x4] sm:$0xf] %v322
        %s327 = sand.u32 %s91, 1
        %s328 = scalar_lea.sflag [#allocation4], %s327
        %s329 = sand.u32 %s91, 1
        %s330 = smul.addr %s329, 8
        %s331 = scalar_lea.vmem [#allocation7], %s330
        // Predicated region
        $region37: #{tpu_custom_call.1} parent=27 // pred_check
          %p332 = pneg %p101
        $region38: #{tpu_custom_call.1} parent=27 // pred_check_branch
          %334 = sbr.rel (%p332) target = $region40
        $region39: #{tpu_custom_call.1} parent=27 // pred_region
          %s336 = ssub.s32 128, 128
          %337 = vsyncadd %s328, %s336
          %s338 = smul.addr %s24, 2
          %s339 = sadd.s32 %s25, %s338
          %s340 = smul.addr %s339, 64
          %s341 = scalar_lea.hbm %s2, %s340
          %s342 = sshll.u32 %s331, 4
          %s343 = int_to_ptr.vmem [resolvable:$true] %s342
          %348 = dma.vmem_to_hbm [thread:$0]  %s343, 128, %s341, %s328, 64, 64, 4
        $region40: #{tpu_custom_call.1} parent=27 // pred_fallthru
          _
      $region28: #{tpu_custom_call.1} parent=5 // pred_fallthru
        _
      %p349 = scmp.le.s32.totalorder 2, %s15
      // Predicated region
      $region41: #{tpu_custom_call.1} parent=5 // pred_check
        %p350 = pneg %p349
      $region42: #{tpu_custom_call.1} parent=5 // pred_check_branch
        %352 = sbr.rel (%p350) target = $region44
      $region43: #{tpu_custom_call.1} parent=5 // pred_region
        %s353 = ssub.s32 %s15, 2
        // Predicated region
        $region45: #{tpu_custom_call.1} parent=43 // pred_check
          %p354 = pneg %p107
        $region46: #{tpu_custom_call.1} parent=43 // pred_check_branch
          %356 = sbr.rel (%p354) target = $region48
        $region47: #{tpu_custom_call.1} parent=43 // pred_region
          %s357 = sand.u32 %s92, 1
          %s358 = scalar_lea.sflag [#allocation4], %s357
          %s359 = sand.u32 %s92, 1
          %s360 = smul.addr %s359, 8
          %s361 = scalar_lea.vmem [#allocation7], %s360
          %362 = dma.done %s358, 128
        $region48: #{tpu_custom_call.1} parent=43 // pred_fallthru
          _
      $region44: #{tpu_custom_call.1} parent=5 // pred_fallthru
        _
    $region6: #{tpu_custom_call.1} parent=1 // loop_footer
      %s19 = sadd.s32 1, %s15
    $region7: #{tpu_custom_call.1} parent=1 // loop_footer_branch
      %14 = sbr.rel target = $region3
    $region8: #{tpu_custom_call.1} parent=1 // loop_exit
      _
    %363 = vsyncpa [#allocation3], 1
    %s364 = scalar_lea.sflag [#allocation3], 1
    %365 = vsyncpa %s364, 1
    %366 = vsyncpa [#allocation6], 1
    %s367 = scalar_lea.sflag [#allocation6], 1
    %368 = vsyncpa %s367, 1
    %369 = vsyncpa [#allocation4], 1
    %s370 = scalar_lea.sflag [#allocation4], 1
    %371 = vsyncpa %s370, 1

</llo_original>
